<compile_context>
chip_gen: v5e
topology: v5e:2x2
jax: 0.10.0
libtpu: 0.0.40
codegen_flags: <defaults>
</compile_context>

<pallas_src>
import functools
import math

import jax
import jax.numpy as jnp
from jax.experimental import pallas as pl
from jax.experimental.pallas import tpu as pltpu


def _layernorm(v, w, b, eps):
    mu = jnp.mean(v, axis=-1, keepdims=True)
    var = jnp.mean((v - mu) ** 2, axis=-1, keepdims=True)
    return (v - mu) * jax.lax.rsqrt(var + eps) * w + b


def multi_ip_router_kernel(
    x_ref, lat_ref,
    ln1w_ref, ln1b_ref, ln2w_ref, ln2b_ref,
    merge_ref, wq_ref, wkv_ref,
    o_ref,
    *, eps,
):
    f32 = jnp.float32

    # LayerNorms in fp32 (norm1 over id_dim on identity features, norm2 over dim
    # on latents). ln*_ref are (1, D) and broadcast over rows.
    xn = _layernorm(x_ref[0].astype(f32), ln1w_ref[...].astype(f32),
                    ln1b_ref[...].astype(f32), eps)          # (n_ids*L, id_dim)
    latn = _layernorm(lat_ref[0].astype(f32), ln2w_ref[...].astype(f32),
                      ln2b_ref[...].astype(f32), eps)         # (n2, dim)

    # id_merge as a block-diagonal matmul: (n_ids, n_ids*L) @ (n_ids*L, id_dim)
    merged = jnp.dot(merge_ref[...].astype(f32), xn,
                     preferred_element_type=f32)              # (n_ids, id_dim)

    # kv = to_kv(merged), q = to_q(latents)
    kv = jnp.dot(merged, wkv_ref[...].astype(f32),
                 preferred_element_type=f32)                  # (n_ids, inner)
    q = jnp.dot(latn, wq_ref[...].astype(f32),
                preferred_element_type=f32)                   # (n2, inner)

    # weights = q @ kv^T : contract last dims of both operands, no explicit .T
    w = jax.lax.dot_general(q, kv,
                            dimension_numbers=(((1,), (1,)), ((), ())),
                            preferred_element_type=f32)       # (n2, n_ids)

    o_ref[0] = w.astype(o_ref.dtype)


def multi_ip_router(x, latents, params, *, eps=1e-5):
    """x: (B, n_ids, id_length, id_dim); latents: (B, n2, dim) -> (B, n2, n_ids)."""
    B, n_ids, L, id_dim = x.shape
    _, n2, dim = latents.shape
    inner = params["wq"].shape[1]
    NL = n_ids * L

    # Flatten identity features to 2-D rows per batch element (row i*L + l).
    x2d = x.reshape(B, NL, id_dim)

    # Block-diagonal merge matrix: merge_mat[i, i*L + l] = w_merge[l].
    w_merge = params["w_merge"]
    merge_mat = jnp.kron(jnp.eye(n_ids, dtype=w_merge.dtype), w_merge[None, :])

    ln1_w = params["ln1_w"].reshape(1, id_dim)
    ln1_b = params["ln1_b"].reshape(1, id_dim)
    ln2_w = params["ln2_w"].reshape(1, dim)
    ln2_b = params["ln2_b"].reshape(1, dim)

    kernel = functools.partial(multi_ip_router_kernel, eps=eps)

    grid_spec = pltpu.PrefetchScalarGridSpec(
        num_scalar_prefetch=0,
        grid=(B,),
        in_specs=[
            pl.BlockSpec((1, NL, id_dim), lambda b: (b, 0, 0)),   # x (flattened)
            pl.BlockSpec((1, n2, dim), lambda b: (b, 0, 0)),      # latents
            pl.BlockSpec((1, id_dim), lambda b: (0, 0)),          # ln1 weight
            pl.BlockSpec((1, id_dim), lambda b: (0, 0)),          # ln1 bias
            pl.BlockSpec((1, dim), lambda b: (0, 0)),             # ln2 weight
            pl.BlockSpec((1, dim), lambda b: (0, 0)),             # ln2 bias
            pl.BlockSpec((n_ids, NL), lambda b: (0, 0)),          # id_merge (block-diag)
            pl.BlockSpec((dim, inner), lambda b: (0, 0)),         # to_q weight (dim, inner)
            pl.BlockSpec((id_dim, inner), lambda b: (0, 0)),      # to_kv weight (id_dim, inner)
        ],
        out_specs=pl.BlockSpec((1, n2, n_ids), lambda b: (b, 0, 0)),
    )

    return pl.pallas_call(
        kernel,
        out_shape=jax.ShapeDtypeStruct((B, n2, n_ids), latents.dtype),
        grid_spec=grid_spec,
        compiler_params=pltpu.CompilerParams(dimension_semantics=("parallel",)),
    )(x2d, latents, ln1_w, ln1_b, ln2_w, ln2_b, merge_mat,
      params["wq"], params["wkv"])


def multi_ip_router_reference(x, latents, params, *, eps=1e-5):
    """Pure-JAX reference mirroring the PyTorch forward (dense, no None items)."""
    def ln(v, w, b):
        mu = jnp.mean(v, -1, keepdims=True)
        var = jnp.mean((v - mu) ** 2, -1, keepdims=True)
        return (v - mu) / jnp.sqrt(var + eps) * w + b

    xn = ln(x, params["ln1_w"], params["ln1_b"])                   # (B, n_ids, L, id_dim)
    latn = ln(latents, params["ln2_w"], params["ln2_b"])           # (B, n2, dim)
    # id_merge(item.transpose(-2,-1)).squeeze(-1): weighted sum over id_length.
    merged = jnp.einsum("bild,l->bid", xn, params["w_merge"])      # (B, n_ids, id_dim)
    q = latn @ params["wq"]                                        # (B, n2, inner)
    kv = merged @ params["wkv"]                                    # (B, n_ids, inner)
    # sub_q.unsqueeze(0) @ sub_kv.transpose(-2,-1), stacked over batch.
    return jnp.einsum("bqc,bkc->bqk", q, kv)                       # (B, n2, n_ids)


if __name__ == "__main__":
    # Small demo shapes consistent with the module (real model: dim=3072,
    # id_dim=2048, id_length=32, inner=2048).
    B, n_ids, L, id_dim = 2, 4, 8, 32
    dim, inner, n2 = 32, 32, 8

    key = jax.random.PRNGKey(0)
    ks = jax.random.split(key, 9)

    x = jax.random.normal(ks[0], (B, n_ids, L, id_dim), jnp.float32)
    latents = jax.random.normal(ks[1], (B, n2, dim), jnp.float32)

    # Synthetic parameters (Linear weights stored pre-transposed as (in, out)).
    params = {
        "ln1_w": 1.0 + 0.1 * jax.random.normal(ks[2], (id_dim,), jnp.float32),
        "ln1_b": 0.1 * jax.random.normal(ks[3], (id_dim,), jnp.float32),
        "ln2_w": 1.0 + 0.1 * jax.random.normal(ks[4], (dim,), jnp.float32),
        "ln2_b": 0.1 * jax.random.normal(ks[5], (dim,), jnp.float32),
        "w_merge": jax.random.normal(ks[6], (L,), jnp.float32) / math.sqrt(L),
        "wq": jax.random.normal(ks[7], (dim, inner), jnp.float32) / math.sqrt(dim),
        "wkv": jax.random.normal(ks[8], (id_dim, inner), jnp.float32) / math.sqrt(id_dim),
    }

    out = multi_ip_router(x, latents, params)
    out = jax.block_until_ready(out)

    ref = multi_ip_router_reference(x, latents, params)
    assert out.shape == (B, n2, n_ids)
    assert jnp.allclose(out, ref, atol=1e-4, rtol=1e-4), float(jnp.max(jnp.abs(out - ref)))

    print("KERNEL_OK")
</pallas_src>

<mosaic_0001>
module attributes {stable_mosaic.version = 11 : i64} {
  func.func @multi_ip_router_kernel(%arg0: i32, %arg1: memref<1x32x32xf32, #tpu.memory_space<vmem>>, %arg2: memref<1x8x32xf32, #tpu.memory_space<vmem>>, %arg3: memref<1x32xf32, #tpu.memory_space<vmem>>, %arg4: memref<1x32xf32, #tpu.memory_space<vmem>>, %arg5: memref<1x32xf32, #tpu.memory_space<vmem>>, %arg6: memref<1x32xf32, #tpu.memory_space<vmem>>, %arg7: memref<4x32xf32, #tpu.memory_space<vmem>>, %arg8: memref<32x32xf32, #tpu.memory_space<vmem>>, %arg9: memref<32x32xf32, #tpu.memory_space<vmem>>, %arg10: memref<1x8x4xf32, #tpu.memory_space<vmem>>) attributes {dimension_semantics = [#tpu.dimension_semantics<parallel>], iteration_bounds = array<i64: 2>, scalar_prefetch = 0 : i64, scratch_operands = 0 : i64, tpu.core_type = #tpu.core_type<tc>, window_params = [{transform_indices = @transform_0, window_bounds = array<i64: 1, 32, 32>}, {transform_indices = @transform_1, window_bounds = array<i64: 1, 8, 32>}, {pipeline_mode = #tpu.pipeline_mode<synchronous>, transform_indices = @transform_2, window_bounds = array<i64: 1, 32>}, {pipeline_mode = #tpu.pipeline_mode<synchronous>, transform_indices = @transform_3, window_bounds = array<i64: 1, 32>}, {pipeline_mode = #tpu.pipeline_mode<synchronous>, transform_indices = @transform_4, window_bounds = array<i64: 1, 32>}, {pipeline_mode = #tpu.pipeline_mode<synchronous>, transform_indices = @transform_5, window_bounds = array<i64: 1, 32>}, {pipeline_mode = #tpu.pipeline_mode<synchronous>, transform_indices = @transform_6, window_bounds = array<i64: 4, 32>}, {pipeline_mode = #tpu.pipeline_mode<synchronous>, transform_indices = @transform_7, window_bounds = array<i64: 32, 32>}, {pipeline_mode = #tpu.pipeline_mode<synchronous>, transform_indices = @transform_8, window_bounds = array<i64: 32, 32>}, {transform_indices = @transform_9, window_bounds = array<i64: 1, 8, 4>}]} {
    %c0 = arith.constant 0 : index
    %c0_0 = arith.constant 0 : index
    %c0_1 = arith.constant 0 : index
    %0 = vector.load %arg1[%c0, %c0_0, %c0_1] : memref<1x32x32xf32, #tpu.memory_space<vmem>>, vector<1x32x32xf32>
    %1 = vector.shape_cast %0 : vector<1x32x32xf32> to vector<32x32xf32>
    %c0_2 = arith.constant 0 : index
    %c0_3 = arith.constant 0 : index
    %2 = vector.load %arg3[%c0_2, %c0_3] : memref<1x32xf32, #tpu.memory_space<vmem>>, vector<1x32xf32>
    %c0_4 = arith.constant 0 : index
    %c0_5 = arith.constant 0 : index
    %3 = vector.load %arg4[%c0_4, %c0_5] : memref<1x32xf32, #tpu.memory_space<vmem>>, vector<1x32xf32>
    %cst = arith.constant dense<0.000000e+00> : vector<32xf32>
    %4 = vector.multi_reduction <add>, %1, %cst [1] : vector<32x32xf32> to vector<32xf32>
    %5 = vector.shape_cast %4 : vector<32xf32> to vector<32x1xf32>
    %cst_6 = arith.constant 3.200000e+01 : f32
    %6 = vector.broadcast %cst_6 : f32 to vector<32x1xf32>
    %7 = arith.divf %5, %6 : vector<32x1xf32>
    %8 = vector.broadcast %7 : vector<32x1xf32> to vector<32x32xf32>
    %9 = arith.subf %1, %8 : vector<32x32xf32>
    %10 = arith.mulf %9, %9 : vector<32x32xf32>
    %cst_7 = arith.constant dense<0.000000e+00> : vector<32xf32>
    %11 = vector.multi_reduction <add>, %10, %cst_7 [1] : vector<32x32xf32> to vector<32xf32>
    %12 = vector.shape_cast %11 : vector<32xf32> to vector<32x1xf32>
    %cst_8 = arith.constant 3.200000e+01 : f32
    %13 = vector.broadcast %cst_8 : f32 to vector<32x1xf32>
    %14 = arith.divf %12, %13 : vector<32x1xf32>
    %15 = vector.broadcast %7 : vector<32x1xf32> to vector<32x32xf32>
    %16 = arith.subf %1, %15 : vector<32x32xf32>
    %cst_9 = arith.constant 9.99999974E-6 : f32
    %17 = vector.broadcast %cst_9 : f32 to vector<32x1xf32>
    %18 = arith.addf %14, %17 : vector<32x1xf32>
    %19 = math.rsqrt %18 : vector<32x1xf32>
    %20 = vector.broadcast %19 : vector<32x1xf32> to vector<32x32xf32>
    %21 = arith.mulf %16, %20 : vector<32x32xf32>
    %22 = vector.broadcast %2 : vector<1x32xf32> to vector<32x32xf32>
    %23 = arith.mulf %21, %22 : vector<32x32xf32>
    %24 = vector.broadcast %3 : vector<1x32xf32> to vector<32x32xf32>
    %25 = arith.addf %23, %24 : vector<32x32xf32>
    %c0_10 = arith.constant 0 : index
    %c0_11 = arith.constant 0 : index
    %c0_12 = arith.constant 0 : index
    %26 = vector.load %arg2[%c0_10, %c0_11, %c0_12] : memref<1x8x32xf32, #tpu.memory_space<vmem>>, vector<1x8x32xf32>
    %27 = vector.shape_cast %26 : vector<1x8x32xf32> to vector<8x32xf32>
    %c0_13 = arith.constant 0 : index
    %c0_14 = arith.constant 0 : index
    %28 = vector.load %arg5[%c0_13, %c0_14] : memref<1x32xf32, #tpu.memory_space<vmem>>, vector<1x32xf32>
    %c0_15 = arith.constant 0 : index
    %c0_16 = arith.constant 0 : index
    %29 = vector.load %arg6[%c0_15, %c0_16] : memref<1x32xf32, #tpu.memory_space<vmem>>, vector<1x32xf32>
    %cst_17 = arith.constant dense<0.000000e+00> : vector<8xf32>
    %30 = vector.multi_reduction <add>, %27, %cst_17 [1] : vector<8x32xf32> to vector<8xf32>
    %31 = vector.shape_cast %30 : vector<8xf32> to vector<8x1xf32>
    %cst_18 = arith.constant 3.200000e+01 : f32
    %32 = vector.broadcast %cst_18 : f32 to vector<8x1xf32>
    %33 = arith.divf %31, %32 : vector<8x1xf32>
    %34 = vector.broadcast %33 : vector<8x1xf32> to vector<8x32xf32>
    %35 = arith.subf %27, %34 : vector<8x32xf32>
    %36 = arith.mulf %35, %35 : vector<8x32xf32>
    %cst_19 = arith.constant dense<0.000000e+00> : vector<8xf32>
    %37 = vector.multi_reduction <add>, %36, %cst_19 [1] : vector<8x32xf32> to vector<8xf32>
    %38 = vector.shape_cast %37 : vector<8xf32> to vector<8x1xf32>
    %cst_20 = arith.constant 3.200000e+01 : f32
    %39 = vector.broadcast %cst_20 : f32 to vector<8x1xf32>
    %40 = arith.divf %38, %39 : vector<8x1xf32>
    %41 = vector.broadcast %33 : vector<8x1xf32> to vector<8x32xf32>
    %42 = arith.subf %27, %41 : vector<8x32xf32>
    %cst_21 = arith.constant 9.99999974E-6 : f32
    %43 = vector.broadcast %cst_21 : f32 to vector<8x1xf32>
    %44 = arith.addf %40, %43 : vector<8x1xf32>
    %45 = math.rsqrt %44 : vector<8x1xf32>
    %46 = vector.broadcast %45 : vector<8x1xf32> to vector<8x32xf32>
    %47 = arith.mulf %42, %46 : vector<8x32xf32>
    %48 = vector.broadcast %28 : vector<1x32xf32> to vector<8x32xf32>
    %49 = arith.mulf %47, %48 : vector<8x32xf32>
    %50 = vector.broadcast %29 : vector<1x32xf32> to vector<8x32xf32>
    %51 = arith.addf %49, %50 : vector<8x32xf32>
    %c0_22 = arith.constant 0 : index
    %c0_23 = arith.constant 0 : index
    %52 = vector.load %arg7[%c0_22, %c0_23] : memref<4x32xf32, #tpu.memory_space<vmem>>, vector<4x32xf32>
    %cst_24 = arith.constant dense<0.000000e+00> : vector<4x32xf32>
    %53 = tpu.matmul %52, %25, %cst_24 {dimension_numbers = #tpu.dot_dimension_numbers<[1], [0], [0], [1], [0, 0, 1, 1], [], []>} : vector<4x32xf32>, vector<32x32xf32>, vector<4x32xf32> -> vector<4x32xf32>
    %c0_25 = arith.constant 0 : index
    %c0_26 = arith.constant 0 : index
    %54 = vector.load %arg9[%c0_25, %c0_26] : memref<32x32xf32, #tpu.memory_space<vmem>>, vector<32x32xf32>
    %cst_27 = arith.constant dense<0.000000e+00> : vector<4x32xf32>
    %55 = tpu.matmul %53, %54, %cst_27 {dimension_numbers = #tpu.dot_dimension_numbers<[1], [0], [0], [1], [0, 0, 1, 1], [], []>} : vector<4x32xf32>, vector<32x32xf32>, vector<4x32xf32> -> vector<4x32xf32>
    %c0_28 = arith.constant 0 : index
    %c0_29 = arith.constant 0 : index
    %56 = vector.load %arg8[%c0_28, %c0_29] : memref<32x32xf32, #tpu.memory_space<vmem>>, vector<32x32xf32>
    %cst_30 = arith.constant dense<0.000000e+00> : vector<8x32xf32>
    %57 = tpu.matmul %51, %56, %cst_30 {dimension_numbers = #tpu.dot_dimension_numbers<[1], [0], [0], [1], [0, 0, 1, 1], [], []>} : vector<8x32xf32>, vector<32x32xf32>, vector<8x32xf32> -> vector<8x32xf32>
    %cst_31 = arith.constant dense<0.000000e+00> : vector<8x4xf32>
    %58 = tpu.matmul %57, %55, %cst_31 {dimension_numbers = #tpu.dot_dimension_numbers<[1], [1], [0], [0], [0, 0, 1, 0], [], []>} : vector<8x32xf32>, vector<4x32xf32>, vector<8x4xf32> -> vector<8x4xf32>
    %c0_32 = arith.constant 0 : index
    %c0_33 = arith.constant 0 : index
    %c0_34 = arith.constant 0 : index
    %59 = vector.load %arg10[%c0_32, %c0_33, %c0_34] : memref<1x8x4xf32, #tpu.memory_space<vmem>>, vector<1x8x4xf32>
    %60 = vector.shape_cast %59 : vector<1x8x4xf32> to vector<8x4xf32>
    %61 = vector.shape_cast %58 : vector<8x4xf32> to vector<1x8x4xf32>
    tpu.vector_store %arg10[%c0_32, %c0_33, %c0_34], %61 {strides = array<i32>} : memref<1x8x4xf32, #tpu.memory_space<vmem>>, vector<1x8x4xf32>,
    return
  }
  func.func @transform_0(%arg0: i32) -> (i32, i32, i32) {
    %c0_i32 = arith.constant 0 : i32
    %c0_i32_0 = arith.constant 0 : i32
    %c0_i32_1 = arith.constant 0 : i32
    return %arg0, %c0_i32, %c0_i32_0 : i32, i32, i32
  }
  func.func @transform_1(%arg0: i32) -> (i32, i32, i32) {
    %c0_i32 = arith.constant 0 : i32
    %c0_i32_0 = arith.constant 0 : i32
    %c0_i32_1 = arith.constant 0 : i32
    return %arg0, %c0_i32, %c0_i32_0 : i32, i32, i32
  }
  func.func @transform_2(%arg0: i32) -> (i32, i32) {
    %c0_i32 = arith.constant 0 : i32
    %c0_i32_0 = arith.constant 0 : i32
    %c0_i32_1 = arith.constant 0 : i32
    return %c0_i32, %c0_i32_0 : i32, i32
  }
  func.func @transform_3(%arg0: i32) -> (i32, i32) {
    %c0_i32 = arith.constant 0 : i32
    %c0_i32_0 = arith.constant 0 : i32
    %c0_i32_1 = arith.constant 0 : i32
    return %c0_i32, %c0_i32_0 : i32, i32
  }
  func.func @transform_4(%arg0: i32) -> (i32, i32) {
    %c0_i32 = arith.constant 0 : i32
    %c0_i32_0 = arith.constant 0 : i32
    %c0_i32_1 = arith.constant 0 : i32
    return %c0_i32, %c0_i32_0 : i32, i32
  }
  func.func @transform_5(%arg0: i32) -> (i32, i32) {
    %c0_i32 = arith.constant 0 : i32
    %c0_i32_0 = arith.constant 0 : i32
    %c0_i32_1 = arith.constant 0 : i32
    return %c0_i32, %c0_i32_0 : i32, i32
  }
  func.func @transform_6(%arg0: i32) -> (i32, i32) {
    %c0_i32 = arith.constant 0 : i32
    %c0_i32_0 = arith.constant 0 : i32
    %c0_i32_1 = arith.constant 0 : i32
    return %c0_i32, %c0_i32_0 : i32, i32
  }
  func.func @transform_7(%arg0: i32) -> (i32, i32) {
    %c0_i32 = arith.constant 0 : i32
    %c0_i32_0 = arith.constant 0 : i32
    %c0_i32_1 = arith.constant 0 : i32
    return %c0_i32, %c0_i32_0 : i32, i32
  }
  func.func @transform_8(%arg0: i32) -> (i32, i32) {
    %c0_i32 = arith.constant 0 : i32
    %c0_i32_0 = arith.constant 0 : i32
    %c0_i32_1 = arith.constant 0 : i32
    return %c0_i32, %c0_i32_0 : i32, i32
  }
  func.func @transform_9(%arg0: i32) -> (i32, i32, i32) {
    %c0_i32 = arith.constant 0 : i32
    %c0_i32_0 = arith.constant 0 : i32
    %c0_i32_1 = arith.constant 0 : i32
    return %arg0, %c0_i32, %c0_i32_0 : i32, i32, i32
  }
}

</mosaic_0001>

<llo_original>
// kernel: tpu_custom_call.1
$region0: #{tpu_custom_call.1}
  #allocation0 [shape = 'u32[]', space=smem, size = 0x4, offset = 0x4, fixed_abs, tag = 'smem constant byte address 0x4 - core index']
  #allocation1 [shape = 'u32[72,128]{1,0:T(1,128)}', space=vmem, size = 0x9000, scoped, tag = 'internal scratch']
  %s0 = inlined_call_operand.hbm [shape: f32[2,32,32], index: 0, kind: input, shape index: {}]
  %s1 = inlined_call_operand.hbm [shape: f32[2,8,32], index: 1, kind: input, shape index: {}]
  %s2 = inlined_call_operand.vmem [shape: f32[1,32], index: 2, kind: input, shape index: {}]
  %s3 = inlined_call_operand.hbm [shape: f32[1,32], index: 3, kind: input, shape index: {}]
  %s4 = inlined_call_operand.hbm [shape: f32[1,32], index: 4, kind: input, shape index: {}]
  %s5 = inlined_call_operand.hbm [shape: f32[1,32], index: 5, kind: input, shape index: {}]
  %s6 = inlined_call_operand.vmem [shape: f32[4,32], index: 6, kind: input, shape index: {}]
  %s7 = inlined_call_operand.hbm [shape: f32[32,32], index: 7, kind: input, shape index: {}]
  %s8 = inlined_call_operand.hbm [shape: f32[32,32], index: 8, kind: input, shape index: {}]
  %s9 = inlined_call_operand.vmem [shape: f32[2,8,4], index: 9, kind: output, shape index: {}]
  %s10 = sld [smem:[#allocation0]]
  $region97: #{tpu_custom_call.1} parent=0
    _
  %s12 = ssub.s32 1, %s10
  %s13 = scalar_select 0, %s12, %s10
  $region1: #{tpu_custom_call.1} parent=0
    #allocation2 [shape = 'u8[32768]{0}', space=vmem, size = 0x8000, scoped, tag = 'input window, operand 0']
    #allocation3 [shape = 's32[2]{0}', space=sflag, size = 0x8, scoped, tag = 'scoped memory for tpu_custom_call.1']
    #allocation4 [shape = 'u8[8192]{0}', space=vmem, size = 0x2000, scoped, tag = 'input window, operand 1']
    #allocation5 [shape = 's32[2]{0}', space=sflag, size = 0x8, scoped, tag = 'scoped memory for tpu_custom_call.1']
    #allocation6 [shape = 'u8[512]{0}', space=vmem, size = 0x400, scoped, tag = 'input window, operand 3, single buffered']
    #allocation7 [shape = 'u8[512]{0}', space=vmem, size = 0x400, scoped, tag = 'input window, operand 4, single buffered']
    #allocation8 [shape = 's32[1]{0}', space=sflag, size = 0x4, scoped, tag = 'scoped memory for tpu_custom_call.1']
    #allocation9 [shape = 'u8[512]{0}', space=vmem, size = 0x400, scoped, tag = 'input window, operand 5, single buffered']
    #allocation10 [shape = 'u8[16384]{0}', space=vmem, size = 0x4000, scoped, tag = 'input window, operand 7, single buffered']
    #allocation11 [shape = 's32[1]{0}', space=sflag, size = 0x4, scoped, tag = 'scoped memory for tpu_custom_call.1']
    #allocation12 [shape = 'u8[16384]{0}', space=vmem, size = 0x4000, scoped, tag = 'input window, operand 8, single buffered']
    %14 = vsyncpa [#allocation3], 0
    %s15 = scalar_lea.sflag [#allocation3], 1
    %16 = vsyncpa %s15, 0
    %17 = vsyncpa [#allocation5], 0
    %s18 = scalar_lea.sflag [#allocation5], 1
    %19 = vsyncpa %s18, 0
    %20 = vsyncpa [#allocation8], 0
    %21 = vsyncpa [#allocation11], 0
    loop: start=0, step=1, limit=4
    $region2: #{tpu_custom_call.1} parent=1 // loop_pre_header
      _
    $region3: #{tpu_custom_call.1} parent=1 // loop_header
      %s23 = sphi 0, %s27
      %p24 = scmp.ge.s32.totalorder %s23, 4
      %s33 = sphi 0, %s35
      %s36 = sphi 0, %s33
      %s37 = sphi 0, %s36
      %s53 = sphi 0, %s37
      %s59 = sphi 0, %s61
      %s62 = sphi 0, %s59
      %s63 = sphi 0, %s62
      %s79 = sphi 0, %s63
      %s83 = sphi 0, %s83
      %s85 = sphi 0, %s83
      %s86 = sphi 0, %s85
      %s100 = sphi 0, %s86
      %s104 = sphi 0, %s104
      %s106 = sphi 0, %s104
      %s107 = sphi 0, %s106
      %s121 = sphi 0, %s107
      %s125 = sphi 0, %s125
      %s127 = sphi 0, %s125
      %s128 = sphi 0, %s127
      %s142 = sphi 0, %s128
      %s146 = sphi 0, %s146
      %s148 = sphi 0, %s146
      %s149 = sphi 0, %s148
      %s163 = sphi 0, %s149
      %s167 = sphi 0, %s167
      %s169 = sphi 0, %s167
      %s170 = sphi 0, %s169
      %s184 = sphi 0, %s170
      %s188 = sphi 0, %s188
      %s190 = sphi 0, %s188
      %s191 = sphi 0, %s190
      %s205 = sphi 0, %s191
      %s209 = sphi 0, %s209
      %s211 = sphi 0, %s209
      %s212 = sphi 0, %s211
      %s226 = sphi 0, %s212
      %s232 = sphi 0, %s234
      %s235 = sphi 0, %s232
      %s236 = sphi 0, %s235
      %s252 = sphi 0, %s236
    $region4: #{tpu_custom_call.1} parent=1 // loop_header_branch
      %26 = sbr.rel (%p24) target = $region8
    $region5: #{tpu_custom_call.1} parent=1 // loop_body
      %s28 = ssub.s32 %s23, 1
      %s29 = ssub.s32 %s23, 2
      %s30 = sadd.s32 %s23, 1
      %s31 = ssub.s32 %s23, %s30
      %p32 = scmp.eq.s32.totalorder %s31, 0
      %s34 = sadd.s32 %s33, 1
      %s35 = scalar_select %p32, %s33, %s34
      %p38 = pneg %p32
      %p39 = scmp.eq.s32.totalorder %s23, 1
      %p40 = por %p38, %p39
      %p41 = scmp.ne.s32.totalorder %s33, %s36
      %p42 = scmp.eq.s32.totalorder %s23, 0
      %p43 = por %p41, %p42
      %p44 = scmp.ne.s32.totalorder %s33, %s36
      %p45 = scmp.eq.s32.totalorder %s28, 1
      %p46 = por %p44, %p45
      %p47 = scmp.ne.s32.totalorder %s36, %s37
      %p48 = scmp.eq.s32.totalorder %s28, 0
      %p49 = por %p47, %p48
      %p50 = scmp.ne.s32.totalorder %s36, %s37
      %p51 = scmp.eq.s32.totalorder %s29, 1
      %p52 = por %p50, %p51
      %p54 = scmp.ne.s32.totalorder %s37, %s53
      %p55 = scmp.eq.s32.totalorder %s29, 0
      %p56 = por %p54, %p55
      %s57 = ssub.s32 %s23, %s30
      %p58 = scmp.eq.s32.totalorder %s57, 0
      %s60 = sadd.s32 %s59, 1
      %s61 = scalar_select %p58, %s59, %s60
      %p64 = pneg %p58
      %p65 = scmp.eq.s32.totalorder %s23, 1
      %p66 = por %p64, %p65
      %p67 = scmp.ne.s32.totalorder %s59, %s62
      %p68 = scmp.eq.s32.totalorder %s23, 0
      %p69 = por %p67, %p68
      %p70 = scmp.ne.s32.totalorder %s59, %s62
      %p71 = scmp.eq.s32.totalorder %s28, 1
      %p72 = por %p70, %p71
      %p73 = scmp.ne.s32.totalorder %s62, %s63
      %p74 = scmp.eq.s32.totalorder %s28, 0
      %p75 = por %p73, %p74
      %p76 = scmp.ne.s32.totalorder %s62, %s63
      %p77 = scmp.eq.s32.totalorder %s29, 1
      %p78 = por %p76, %p77
      %p80 = scmp.ne.s32.totalorder %s63, %s79
      %p81 = scmp.eq.s32.totalorder %s29, 0
      %p82 = por %p80, %p81
      %s84 = sadd.s32 %s83, 1
      %p87 = scmp.eq.s32.totalorder %s23, 1
      %p88 = scmp.ne.s32.totalorder %s83, %s85
      %p89 = scmp.eq.s32.totalorder %s23, 0
      %p90 = por %p88, %p89
      %p91 = scmp.ne.s32.totalorder %s83, %s85
      %p92 = scmp.eq.s32.totalorder %s28, 1
      %p93 = por %p91, %p92
      %p94 = scmp.ne.s32.totalorder %s85, %s86
      %p95 = scmp.eq.s32.totalorder %s28, 0
      %p96 = por %p94, %p95
      %p97 = scmp.ne.s32.totalorder %s85, %s86
      %p98 = scmp.eq.s32.totalorder %s29, 1
      %p99 = por %p97, %p98
      %p101 = scmp.ne.s32.totalorder %s86, %s100
      %p102 = scmp.eq.s32.totalorder %s29, 0
      %p103 = por %p101, %p102
      %s105 = sadd.s32 %s104, 1
      %p108 = scmp.eq.s32.totalorder %s23, 1
      %p109 = scmp.ne.s32.totalorder %s104, %s106
      %p110 = scmp.eq.s32.totalorder %s23, 0
      %p111 = por %p109, %p110
      %p112 = scmp.ne.s32.totalorder %s104, %s106
      %p113 = scmp.eq.s32.totalorder %s28, 1
      %p114 = por %p112, %p113
      %p115 = scmp.ne.s32.totalorder %s106, %s107
      %p116 = scmp.eq.s32.totalorder %s28, 0
      %p117 = por %p115, %p116
      %p118 = scmp.ne.s32.totalorder %s106, %s107
      %p119 = scmp.eq.s32.totalorder %s29, 1
      %p120 = por %p118, %p119
      %p122 = scmp.ne.s32.totalorder %s107, %s121
      %p123 = scmp.eq.s32.totalorder %s29, 0
      %p124 = por %p122, %p123
      %s126 = sadd.s32 %s125, 1
      %p129 = scmp.eq.s32.totalorder %s23, 1
      %p130 = scmp.ne.s32.totalorder %s125, %s127
      %p131 = scmp.eq.s32.totalorder %s23, 0
      %p132 = por %p130, %p131
      %p133 = scmp.ne.s32.totalorder %s125, %s127
      %p134 = scmp.eq.s32.totalorder %s28, 1
      %p135 = por %p133, %p134
      %p136 = scmp.ne.s32.totalorder %s127, %s128
      %p137 = scmp.eq.s32.totalorder %s28, 0
      %p138 = por %p136, %p137
      %p139 = scmp.ne.s32.totalorder %s127, %s128
      %p140 = scmp.eq.s32.totalorder %s29, 1
      %p141 = por %p139, %p140
      %p143 = scmp.ne.s32.totalorder %s128, %s142
      %p144 = scmp.eq.s32.totalorder %s29, 0
      %p145 = por %p143, %p144
      %s147 = sadd.s32 %s146, 1
      %p150 = scmp.eq.s32.totalorder %s23, 1
      %p151 = scmp.ne.s32.totalorder %s146, %s148
      %p152 = scmp.eq.s32.totalorder %s23, 0
      %p153 = por %p151, %p152
      %p154 = scmp.ne.s32.totalorder %s146, %s148
      %p155 = scmp.eq.s32.totalorder %s28, 1
      %p156 = por %p154, %p155
      %p157 = scmp.ne.s32.totalorder %s148, %s149
      %p158 = scmp.eq.s32.totalorder %s28, 0
      %p159 = por %p157, %p158
      %p160 = scmp.ne.s32.totalorder %s148, %s149
      %p161 = scmp.eq.s32.totalorder %s29, 1
      %p162 = por %p160, %p161
      %p164 = scmp.ne.s32.totalorder %s149, %s163
      %p165 = scmp.eq.s32.totalorder %s29, 0
      %p166 = por %p164, %p165
      %s168 = sadd.s32 %s167, 1
      %p171 = scmp.eq.s32.totalorder %s23, 1
      %p172 = scmp.ne.s32.totalorder %s167, %s169
      %p173 = scmp.eq.s32.totalorder %s23, 0
      %p174 = por %p172, %p173
      %p175 = scmp.ne.s32.totalorder %s167, %s169
      %p176 = scmp.eq.s32.totalorder %s28, 1
      %p177 = por %p175, %p176
      %p178 = scmp.ne.s32.totalorder %s169, %s170
      %p179 = scmp.eq.s32.totalorder %s28, 0
      %p180 = por %p178, %p179
      %p181 = scmp.ne.s32.totalorder %s169, %s170
      %p182 = scmp.eq.s32.totalorder %s29, 1
      %p183 = por %p181, %p182
      %p185 = scmp.ne.s32.totalorder %s170, %s184
      %p186 = scmp.eq.s32.totalorder %s29, 0
      %p187 = por %p185, %p186
      %s189 = sadd.s32 %s188, 1
      %p192 = scmp.eq.s32.totalorder %s23, 1
      %p193 = scmp.ne.s32.totalorder %s188, %s190
      %p194 = scmp.eq.s32.totalorder %s23, 0
      %p195 = por %p193, %p194
      %p196 = scmp.ne.s32.totalorder %s188, %s190
      %p197 = scmp.eq.s32.totalorder %s28, 1
      %p198 = por %p196, %p197
      %p199 = scmp.ne.s32.totalorder %s190, %s191
      %p200 = scmp.eq.s32.totalorder %s28, 0
      %p201 = por %p199, %p200
      %p202 = scmp.ne.s32.totalorder %s190, %s191
      %p203 = scmp.eq.s32.totalorder %s29, 1
      %p204 = por %p202, %p203
      %p206 = scmp.ne.s32.totalorder %s191, %s205
      %p207 = scmp.eq.s32.totalorder %s29, 0
      %p208 = por %p206, %p207
      %s210 = sadd.s32 %s209, 1
      %p213 = scmp.eq.s32.totalorder %s23, 1
      %p214 = scmp.ne.s32.totalorder %s209, %s211
      %p215 = scmp.eq.s32.totalorder %s23, 0
      %p216 = por %p214, %p215
      %p217 = scmp.ne.s32.totalorder %s209, %s211
      %p218 = scmp.eq.s32.totalorder %s28, 1
      %p219 = por %p217, %p218
      %p220 = scmp.ne.s32.totalorder %s211, %s212
      %p221 = scmp.eq.s32.totalorder %s28, 0
      %p222 = por %p220, %p221
      %p223 = scmp.ne.s32.totalorder %s211, %s212
      %p224 = scmp.eq.s32.totalorder %s29, 1
      %p225 = por %p223, %p224
      %p227 = scmp.ne.s32.totalorder %s212, %s226
      %p228 = scmp.eq.s32.totalorder %s29, 0
      %p229 = por %p227, %p228
      %s230 = ssub.s32 %s23, %s30
      %p231 = scmp.eq.s32.totalorder %s230, 0
      %s233 = sadd.s32 %s232, 1
      %s234 = scalar_select %p231, %s232, %s233
      %p237 = pneg %p231
      %p238 = scmp.eq.s32.totalorder %s23, 1
      %p239 = por %p237, %p238
      %p240 = scmp.ne.s32.totalorder %s232, %s235
      %p241 = scmp.eq.s32.totalorder %s23, 0
      %p242 = por %p240, %p241
      %p243 = scmp.ne.s32.totalorder %s232, %s235
      %p244 = scmp.eq.s32.totalorder %s28, 1
      %p245 = por %p243, %p244
      %p246 = scmp.ne.s32.totalorder %s235, %s236
      %p247 = scmp.eq.s32.totalorder %s28, 0
      %p248 = por %p246, %p247
      %p249 = scmp.ne.s32.totalorder %s235, %s236
      %p250 = scmp.eq.s32.totalorder %s29, 1
      %p251 = por %p249, %p250
      %p253 = scmp.ne.s32.totalorder %s236, %s252
      %p254 = scmp.eq.s32.totalorder %s29, 0
      %p255 = por %p253, %p254
      %p256 = scmp.le.s32.totalorder 1, %s23
      %p257 = scmp.lt.s32.totalorder %s23, 3
      %p258 = pnand %p256, %p257
      %p259 = pneg %p258
      // Predicated region
      $region9: #{tpu_custom_call.1} parent=5 // pred_check
        _
      $region10: #{tpu_custom_call.1} parent=5 // pred_check_branch
        %261 = sbr.rel (%p258) target = $region12
      $region11: #{tpu_custom_call.1} parent=5 // pred_region
        %s262 = ssub.s32 %s23, 1
        // Predicated region
        $region13: #{tpu_custom_call.1} parent=11 // pred_check
          %p263 = pneg %p96
        $region14: #{tpu_custom_call.1} parent=11 // pred_check_branch
          %265 = sbr.rel (%p263) target = $region16
        $region15: #{tpu_custom_call.1} parent=11 // pred_region
          _
        $region16: #{tpu_custom_call.1} parent=11 // pred_fallthru
          _
        // Predicated region
        $region17: #{tpu_custom_call.1} parent=11 // pred_check
          %p266 = pneg %p117
        $region18: #{tpu_custom_call.1} parent=11 // pred_check_branch
          %268 = sbr.rel (%p266) target = $region20
        $region19: #{tpu_custom_call.1} parent=11 // pred_region
          %270 = vsyncadd [#allocation5], 0
          %s272 = sshll.u32 %s3, 4
          %s273 = int_to_ptr.hbm [resolvable:$true] %s272
          %s274 = sshll.u32 [#allocation6], 4
          %s275 = int_to_ptr.vmem [resolvable:$true] %s274
          %277 = dma.hbm_to_vmem [thread:$0]  %s273, 16, %s275, [#allocation5]
        $region20: #{tpu_custom_call.1} parent=11 // pred_fallthru
          _
        // Predicated region
        $region21: #{tpu_custom_call.1} parent=11 // pred_check
          %p278 = pneg %p138
        $region22: #{tpu_custom_call.1} parent=11 // pred_check_branch
          %280 = sbr.rel (%p278) target = $region24
        $region23: #{tpu_custom_call.1} parent=11 // pred_region
          %282 = vsyncadd [#allocation8], 0
          %s284 = sshll.u32 %s4, 4
          %s285 = int_to_ptr.hbm [resolvable:$true] %s284
          %s286 = sshll.u32 [#allocation7], 4
          %s287 = int_to_ptr.vmem [resolvable:$true] %s286
          %289 = dma.hbm_to_vmem [thread:$0]  %s285, 16, %s287, [#allocation8]
        $region24: #{tpu_custom_call.1} parent=11 // pred_fallthru
          _
        // Predicated region
        $region25: #{tpu_custom_call.1} parent=11 // pred_check
          %p290 = pneg %p159
        $region26: #{tpu_custom_call.1} parent=11 // pred_check_branch
          %292 = sbr.rel (%p290) target = $region28
        $region27: #{tpu_custom_call.1} parent=11 // pred_region
          %294 = vsyncadd [#allocation8], 0
          %s296 = sshll.u32 %s5, 4
          %s297 = int_to_ptr.hbm [resolvable:$true] %s296
          %s298 = sshll.u32 [#allocation9], 4
          %s299 = int_to_ptr.vmem [resolvable:$true] %s298
          %301 = dma.hbm_to_vmem [thread:$0]  %s297, 16, %s299, [#allocation8]
        $region28: #{tpu_custom_call.1} parent=11 // pred_fallthru
          _
        // Predicated region
        $region29: #{tpu_custom_call.1} parent=11 // pred_check
          %p302 = pneg %p180
        $region30: #{tpu_custom_call.1} parent=11 // pred_check_branch
          %304 = sbr.rel (%p302) target = $region32
        $region31: #{tpu_custom_call.1} parent=11 // pred_region
          _
        $region32: #{tpu_custom_call.1} parent=11 // pred_fallthru
          _
        // Predicated region
        $region33: #{tpu_custom_call.1} parent=11 // pred_check
          %p305 = pneg %p201
        $region34: #{tpu_custom_call.1} parent=11 // pred_check_branch
          %307 = sbr.rel (%p305) target = $region36
        $region35: #{tpu_custom_call.1} parent=11 // pred_region
          %309 = vsyncadd [#allocation11], 0
          %s310 = sshll.u32 %s7, 4
          %s311 = int_to_ptr.hbm [resolvable:$true] %s310
          %s312 = sshll.u32 [#allocation10], 4
          %s313 = int_to_ptr.vmem [resolvable:$true] %s312
          %318 = dma.hbm_to_vmem [thread:$0]  %s311, 512, %s313, [#allocation11], 128, 128, 8
        $region36: #{tpu_custom_call.1} parent=11 // pred_fallthru
          _
        // Predicated region
        $region37: #{tpu_custom_call.1} parent=11 // pred_check
          %p319 = pneg %p222
        $region38: #{tpu_custom_call.1} parent=11 // pred_check_branch
          %321 = sbr.rel (%p319) target = $region40
        $region39: #{tpu_custom_call.1} parent=11 // pred_region
          %323 = vsyncadd [#allocation11], 0
          %s324 = sshll.u32 %s8, 4
          %s325 = int_to_ptr.hbm [resolvable:$true] %s324
          %s326 = sshll.u32 [#allocation12], 4
          %s327 = int_to_ptr.vmem [resolvable:$true] %s326
          %332 = dma.hbm_to_vmem [thread:$0]  %s325, 512, %s327, [#allocation11], 128, 128, 8
        $region40: #{tpu_custom_call.1} parent=11 // pred_fallthru
          _
      $region12: #{tpu_custom_call.1} parent=5 // pred_fallthru
        _
      %p333 = scmp.lt.s32.totalorder %s23, 2
      // Predicated region
      $region41: #{tpu_custom_call.1} parent=5 // pred_check
        %p334 = pneg %p333
      $region42: #{tpu_custom_call.1} parent=5 // pred_check_branch
        %336 = sbr.rel (%p334) target = $region44
      $region43: #{tpu_custom_call.1} parent=5 // pred_region
        // Predicated region
        $region45: #{tpu_custom_call.1} parent=43 // pred_check
          %p337 = pneg %p43
        $region46: #{tpu_custom_call.1} parent=43 // pred_check_branch
          %339 = sbr.rel (%p337) target = $region48
        $region47: #{tpu_custom_call.1} parent=43 // pred_region
          %s340 = sand.u32 %s33, 1
          %s341 = scalar_lea.sflag [#allocation3], %s340
          %s342 = sand.u32 %s33, 1
          %s343 = smul.addr %s342, 32
          %s344 = scalar_lea.vmem [#allocation2], %s343
          %346 = vsyncadd %s341, 0
          %s347 = smul.addr %s23, 4
          %s348 = smul.addr %s347, 8
          %s349 = scalar_lea.hbm %s0, %s348
          %s350 = sshll.u32 %s349, 4
          %s351 = int_to_ptr.hbm [resolvable:$true] %s350
          %s352 = sshll.u32 %s344, 4
          %s353 = int_to_ptr.vmem [resolvable:$true] %s352
          %358 = dma.hbm_to_vmem [thread:$0]  %s351, 512, %s353, %s341, 128, 128, 8
        $region48: #{tpu_custom_call.1} parent=43 // pred_fallthru
          _
        // Predicated region
        $region49: #{tpu_custom_call.1} parent=43 // pred_check
          %p359 = pneg %p69
        $region50: #{tpu_custom_call.1} parent=43 // pred_check_branch
          %361 = sbr.rel (%p359) target = $region52
        $region51: #{tpu_custom_call.1} parent=43 // pred_region
          %s362 = sand.u32 %s23, 1
          %s363 = scalar_lea.sflag [#allocation5], %s362
          %s364 = sand.u32 %s59, 1
          %s365 = smul.addr %s364, 8
          %s366 = scalar_lea.vmem [#allocation4], %s365
          %368 = vsyncadd %s363, 0
          %s369 = smul.addr %s23, 8
          %s370 = scalar_lea.hbm %s1, %s369
          %s372 = sshll.u32 %s370, 4
          %s373 = int_to_ptr.hbm [resolvable:$true] %s372
          %s374 = sshll.u32 %s366, 4
          %s375 = int_to_ptr.vmem [resolvable:$true] %s374
          %377 = dma.hbm_to_vmem [thread:$0]  %s373, 128, %s375, %s363
        $region52: #{tpu_custom_call.1} parent=43 // pred_fallthru
          _
      $region44: #{tpu_custom_call.1} parent=5 // pred_fallthru
        _
      %p378 = scmp.le.s32.totalorder 1, %s23
      %p379 = scmp.lt.s32.totalorder %s23, 3
      %p380 = pnand %p378, %p379
      %p381 = pneg %p380
      // Predicated region
      $region53: #{tpu_custom_call.1} parent=5 // pred_check
        _
      $region54: #{tpu_custom_call.1} parent=5 // pred_check_branch
        %383 = sbr.rel (%p380) target = $region56
      $region55: #{tpu_custom_call.1} parent=5 // pred_region
        %s384 = ssub.s32 %s23, 1
        %s385 = sand.u32 %s36, 1
        %s386 = scalar_lea.sflag [#allocation3], %s385
        %s387 = sand.u32 %s36, 1
        %s388 = smul.addr %s387, 32
        %s389 = scalar_lea.vmem [#allocation2], %s388
        // Predicated region
        $region57: #{tpu_custom_call.1} parent=55 // pred_check
          %p390 = pneg %p49
        $region58: #{tpu_custom_call.1} parent=55 // pred_check_branch
          %392 = sbr.rel (%p390) target = $region60
        $region59: #{tpu_custom_call.1} parent=55 // pred_region
          %394 = dma.done %s386, 512
        $region60: #{tpu_custom_call.1} parent=55 // pred_fallthru
          _
        %s395 = sand.u32 %s28, 1
        %s396 = scalar_lea.sflag [#allocation5], %s395
        %s397 = sand.u32 %s62, 1
        %s398 = smul.addr %s397, 8
        %s399 = scalar_lea.vmem [#allocation4], %s398
        // Predicated region
        $region61: #{tpu_custom_call.1} parent=55 // pred_check
          %p400 = pneg %p75
        $region62: #{tpu_custom_call.1} parent=55 // pred_check_branch
          %402 = sbr.rel (%p400) target = $region64
        $region63: #{tpu_custom_call.1} parent=55 // pred_region
          %404 = dma.done %s396, 128
        $region64: #{tpu_custom_call.1} parent=55 // pred_fallthru
          _
        // Predicated region
        $region65: #{tpu_custom_call.1} parent=55 // pred_check
          %p405 = pneg %p117
        $region66: #{tpu_custom_call.1} parent=55 // pred_check_branch
          %407 = sbr.rel (%p405) target = $region68
        $region67: #{tpu_custom_call.1} parent=55 // pred_region
          %409 = dma.done [#allocation5], 16
        $region68: #{tpu_custom_call.1} parent=55 // pred_fallthru
          _
        // Predicated region
        $region69: #{tpu_custom_call.1} parent=55 // pred_check
          %p410 = pneg %p138
        $region70: #{tpu_custom_call.1} parent=55 // pred_check_branch
          %412 = sbr.rel (%p410) target = $region72
        $region71: #{tpu_custom_call.1} parent=55 // pred_region
          %414 = dma.done [#allocation8], 16
        $region72: #{tpu_custom_call.1} parent=55 // pred_fallthru
          _
        // Predicated region
        $region73: #{tpu_custom_call.1} parent=55 // pred_check
          %p415 = pneg %p159
        $region74: #{tpu_custom_call.1} parent=55 // pred_check_branch
          %417 = sbr.rel (%p415) target = $region76
        $region75: #{tpu_custom_call.1} parent=55 // pred_region
          %419 = dma.done [#allocation8], 16
        $region76: #{tpu_custom_call.1} parent=55 // pred_fallthru
          _
        // Predicated region
        $region77: #{tpu_custom_call.1} parent=55 // pred_check
          %p420 = pneg %p201
        $region78: #{tpu_custom_call.1} parent=55 // pred_check_branch
          %422 = sbr.rel (%p420) target = $region80
        $region79: #{tpu_custom_call.1} parent=55 // pred_region
          %424 = dma.done [#allocation11], 512
        $region80: #{tpu_custom_call.1} parent=55 // pred_fallthru
          _
        // Predicated region
        $region81: #{tpu_custom_call.1} parent=55 // pred_check
          %p425 = pneg %p222
        $region82: #{tpu_custom_call.1} parent=55 // pred_check_branch
          %427 = sbr.rel (%p425) target = $region84
        $region83: #{tpu_custom_call.1} parent=55 // pred_region
          %429 = dma.done [#allocation11], 512
        $region84: #{tpu_custom_call.1} parent=55 // pred_fallthru
          _
        %s430 = sand.u32 %s36, 1
        %s431 = scalar_lea.sflag [#allocation3], %s430
        %s432 = sand.u32 %s36, 1
        %s433 = smul.addr %s432, 32
        %s434 = scalar_lea.vmem [#allocation2], %s433
        %p435 = pneg %p49
        %p436 = pneg %p46
        %s437 = sand.u32 %s28, 1
        %s438 = scalar_lea.sflag [#allocation5], %s437
        %s439 = sand.u32 %s62, 1
        %s440 = smul.addr %s439, 8
        %s441 = scalar_lea.vmem [#allocation4], %s440
        %p442 = pneg %p75
        %p443 = pneg %p72
        %p444 = pneg %p96
        %p445 = pneg %p93
        %p446 = pneg %p117
        %p447 = pneg %p114
        %p448 = pneg %p138
        %p449 = pneg %p135
        %p450 = pneg %p159
        %p451 = pneg %p156
        %p452 = pneg %p180
        %p453 = pneg %p177
        %p454 = pneg %p201
        %p455 = pneg %p198
        %p456 = pneg %p222
        %p457 = pneg %p219
        %p458 = pneg %p248
        %p459 = pneg %p245
        %p460 = scmp.lt.s32.totalorder %s28, 1
        %s461 = scalar_select %p460, %s28, 1
        %s462 = smul.addr %s461, 8
        %s463 = scalar_lea.vmem %s9, %s462
        %p464 = scmp.lt.s32.totalorder %s28, 1
        %s465 = scalar_select %p464, %s28, 1
        %s466 = smul.addr %s465, 8
        %s467 = scalar_lea.vmem %s9, %s466
        %v468 = vld [vmem:[%s389] sm:$0xff]
        %v469 = vld [vmem:[%s389 + $0x8] sm:$0xff]
        %v470 = vld [vmem:[%s389 + $0x10] sm:$0xff]
        %v471 = vld [vmem:[%s389 + $0x18] sm:$0xff]
        %v472 = vld [vmem:[%s2] sm:$0x1]
        %v473 = vld [vmem:[#allocation6] sm:$0x1]
        %vm474 = vcmask 261120
        %v475 = vsel %vm474, %v468, 0.0
        %476 = vadd.xlane.f32.xlu0 %v475
        %v477 = vpop.xlane.xlu0 %476
        %v478 = vsel %vm474, %v469, 0.0
        %479 = vadd.xlane.f32.xlu0 %v478
        %v480 = vpop.xlane.xlu0 %479
        %v481 = vsel %vm474, %v470, 0.0
        %482 = vadd.xlane.f32.xlu0 %v481
        %v483 = vpop.xlane.xlu0 %482
        %v484 = vsel %vm474, %v471, 0.0
        %485 = vadd.xlane.f32.xlu0 %v484
        %v486 = vpop.xlane.xlu0 %485
        %v487 = vrcp.pop 32.0
        %v488 = vmul.f32 32.0, %v487
        %v489 = vsub.f32 1.0, %v488
        %v490 = vmul.f32 %v487, %v489
        %v491 = vadd.f32 %v487, %v490
        %vm492 = vweird.f32 %v487
        %v493 = vsel %vm492, %v487, %v491
        %v494 = vmul.f32 %v477, %v493
        %v495 = vmul.f32 %v480, %v493
        %v496 = vmul.f32 %v483, %v493
        %v497 = vmul.f32 %v486, %v493
        %v498 = vsub.f32 %v468, %v494
        %v499 = vsub.f32 %v469, %v495
        %v500 = vsub.f32 %v470, %v496
        %v501 = vsub.f32 %v471, %v497
        %v502 = vmul.f32 %v498, %v498
        %v503 = vmul.f32 %v499, %v499
        %v504 = vmul.f32 %v500, %v500
        %v505 = vmul.f32 %v501, %v501
        %v506 = vsel %vm474, %v502, 0.0
        %507 = vadd.xlane.f32.xlu0 %v506
        %v508 = vpop.xlane.xlu0 %507
        %v509 = vsel %vm474, %v503, 0.0
        %510 = vadd.xlane.f32.xlu0 %v509
        %v511 = vpop.xlane.xlu0 %510
        %v512 = vsel %vm474, %v504, 0.0
        %513 = vadd.xlane.f32.xlu0 %v512
        %v514 = vpop.xlane.xlu0 %513
        %v515 = vsel %vm474, %v505, 0.0
        %516 = vadd.xlane.f32.xlu0 %v515
        %v517 = vpop.xlane.xlu0 %516
        %v518 = vmul.f32 %v508, %v493
        %v519 = vmul.f32 %v511, %v493
        %v520 = vmul.f32 %v514, %v493
        %v521 = vmul.f32 %v517, %v493
        %v522 = vadd.f32 %v518, 1e-05
        %v523 = vadd.f32 %v519, 1e-05
        %v524 = vadd.f32 %v520, 1e-05
        %v525 = vadd.f32 %v521, 1e-05
        %v526 = vrsqrt.pop %v522
        %v527 = vmul.f32 %v526, %v522
        %v528 = vmul.f32 %v527, %v526
        %v529 = vmul.f32 0.5, %v528
        %v530 = vsub.f32 1.5, %v529
        %v531 = vmul.f32 %v526, %v530
        %vm532 = vweird.f32 %v522
        %vm533 = vweird.f32 %v526
        %vm534 = vmor %vm532, %vm533
        %v535 = vsel %vm534, %v526, %v531
        %v536 = vrsqrt.pop %v523
        %v537 = vmul.f32 %v536, %v523
        %v538 = vmul.f32 %v537, %v536
        %v539 = vmul.f32 0.5, %v538
        %v540 = vsub.f32 1.5, %v539
        %v541 = vmul.f32 %v536, %v540
        %vm542 = vweird.f32 %v523
        %vm543 = vweird.f32 %v536
        %vm544 = vmor %vm542, %vm543
        %v545 = vsel %vm544, %v536, %v541
        %v546 = vrsqrt.pop %v524
        %v547 = vmul.f32 %v546, %v524
        %v548 = vmul.f32 %v547, %v546
        %v549 = vmul.f32 0.5, %v548
        %v550 = vsub.f32 1.5, %v549
        %v551 = vmul.f32 %v546, %v550
        %vm552 = vweird.f32 %v524
        %vm553 = vweird.f32 %v546
        %vm554 = vmor %vm552, %vm553
        %v555 = vsel %vm554, %v546, %v551
        %v556 = vrsqrt.pop %v525
        %v557 = vmul.f32 %v556, %v525
        %v558 = vmul.f32 %v557, %v556
        %v559 = vmul.f32 0.5, %v558
        %v560 = vsub.f32 1.5, %v559
        %v561 = vmul.f32 %v556, %v560
        %vm562 = vweird.f32 %v525
        %vm563 = vweird.f32 %v556
        %vm564 = vmor %vm562, %vm563
        %v565 = vsel %vm564, %v556, %v561
        %v566 = vmul.f32 %v498, %v535
        %v567 = vmul.f32 %v499, %v545
        %v568 = vmul.f32 %v500, %v555
        %v569 = vmul.f32 %v501, %v565
        %v571 = vperm.slane %v472, 0
        %v573 = vmul.f32 %v566, %v571
        %v574 = vmul.f32 %v567, %v571
        %v575 = vmul.f32 %v568, %v571
        %v576 = vmul.f32 %v569, %v571
        %v578 = vperm.slane %v473, 0
        %v580 = vadd.f32 %v573, %v578
        %v581 = vadd.f32 %v574, %v578
        %v582 = vadd.f32 %v575, %v578
        %v583 = vadd.f32 %v576, %v578
        %v584 = vld [vmem:[%s399] sm:$0xff]
        %v585 = vld [vmem:[#allocation7] sm:$0x1]
        %v586 = vld [vmem:[#allocation9] sm:$0x1]
        %v587 = vsel %vm474, %v584, 0.0
        %588 = vadd.xlane.f32.xlu0 %v587
        %v589 = vpop.xlane.xlu0 %588
        %v590 = vmul.f32 %v589, %v493
        %v591 = vsub.f32 %v584, %v590
        %v592 = vmul.f32 %v591, %v591
        %v593 = vsel %vm474, %v592, 0.0
        %594 = vadd.xlane.f32.xlu0 %v593
        %v595 = vpop.xlane.xlu0 %594
        %v596 = vmul.f32 %v595, %v493
        %v597 = vadd.f32 %v596, 1e-05
        %v598 = vrsqrt.pop %v597
        %v599 = vmul.f32 %v598, %v597
        %v600 = vmul.f32 %v599, %v598
        %v601 = vmul.f32 0.5, %v600
        %v602 = vsub.f32 1.5, %v601
        %v603 = vmul.f32 %v598, %v602
        %vm604 = vweird.f32 %v597
        %vm605 = vweird.f32 %v598
        %vm606 = vmor %vm604, %vm605
        %v607 = vsel %vm606, %v598, %v603
        %v608 = vmul.f32 %v591, %v607
        %v610 = vperm.slane %v585, 0
        %v612 = vmul.f32 %v608, %v610
        %v614 = vperm.slane %v586, 0
        %v616 = vadd.f32 %v612, %v614
        %v617 = vld [vmem:[%s6] sm:$0xf]
        %v619 = vsel %vm474, %v617, 0
        %621 = vmatpush.msra.mxu0 0.0
        %622 = vmatpush.msra.mxu0 0.0
        %623 = vmatpush.msra.mxu0 0.0
        %624 = vmatpush.msra.mxu0 0.0
        %625 = vmatpush.msra.mxu0 0.0
        %626 = vmatpush.msra.mxu0 0.0
        %627 = vmatpush.msra.mxu0 0.0
        %628 = vmatpush.msra.mxu0 0.0
        %629 = vmatpush.msra.mxu0 0.0
        %630 = vmatpush.msra.mxu0 0.0
        %631 = vmatpush.msra.mxu0 0.0
        %632 = vmatpush.msra.mxu0 0.0
        %633 = vmatpush.msra.mxu0 %v583
        %634 = vmatpush.msra.mxu0 %v582
        %635 = vmatpush.msra.mxu0 %v581
        %636 = vmatpush.msra.mxu0 %v580
        %637 = vmatmul.f32.gmra.mxu0 %v619
        %v638 = vpop.f32.mrf.mxu0
        %v639 = vadd.f32 0.0, %v638
        %640 = vdwg.mxu0
        %v641 = vld [vmem:[#allocation12] sm:$0xff]
        %v642 = vld [vmem:[#allocation12 + $0x8] sm:$0xff]
        %v643 = vld [vmem:[#allocation12 + $0x10] sm:$0xff]
        %v644 = vld [vmem:[#allocation12 + $0x18] sm:$0xff]
        %v646 = vsel %vm474, %v639, 0
        %648 = vmatpush.msra.mxu0 0.0
        %649 = vmatpush.msra.mxu0 0.0
        %650 = vmatpush.msra.mxu0 0.0
        %651 = vmatpush.msra.mxu0 0.0
        %652 = vmatpush.msra.mxu0 0.0
        %653 = vmatpush.msra.mxu0 0.0
        %654 = vmatpush.msra.mxu0 0.0
        %655 = vmatpush.msra.mxu0 0.0
        %656 = vmatpush.msra.mxu0 0.0
        %657 = vmatpush.msra.mxu0 0.0
        %658 = vmatpush.msra.mxu0 0.0
        %659 = vmatpush.msra.mxu0 0.0
        %660 = vmatpush.msra.mxu0 %v644
        %661 = vmatpush.msra.mxu0 %v643
        %662 = vmatpush.msra.mxu0 %v642
        %663 = vmatpush.msra.mxu0 %v641
        %664 = vmatmul.f32.gmra.mxu0 %v646
        %v665 = vpop.f32.mrf.mxu0
        %v666 = vadd.f32 0.0, %v665
        %667 = vdwg.mxu0
        %v668 = vld [vmem:[#allocation10] sm:$0xff]
        %v669 = vld [vmem:[#allocation10 + $0x8] sm:$0xff]
        %v670 = vld [vmem:[#allocation10 + $0x10] sm:$0xff]
        %v671 = vld [vmem:[#allocation10 + $0x18] sm:$0xff]
        %v673 = vsel %vm474, %v616, 0
        %675 = vmatpush.msra.mxu0 0.0
        %676 = vmatpush.msra.mxu0 0.0
        %677 = vmatpush.msra.mxu0 0.0
        %678 = vmatpush.msra.mxu0 0.0
        %679 = vmatpush.msra.mxu0 0.0
        %680 = vmatpush.msra.mxu0 0.0
        %681 = vmatpush.msra.mxu0 0.0
        %682 = vmatpush.msra.mxu0 0.0
        %683 = vmatpush.msra.mxu0 0.0
        %684 = vmatpush.msra.mxu0 0.0
        %685 = vmatpush.msra.mxu0 0.0
        %686 = vmatpush.msra.mxu0 0.0
        %687 = vmatpush.msra.mxu0 %v671
        %688 = vmatpush.msra.mxu0 %v670
        %689 = vmatpush.msra.mxu0 %v669
        %690 = vmatpush.msra.mxu0 %v668
        %691 = vmatmul.f32.gmra.mxu0 %v673
        %v692 = vpop.f32.mrf.mxu0
        %v693 = vadd.f32 0.0, %v692
        %694 = vdwg.mxu0
        %v696 = vsel %vm474, %v693, 0
        %v699 = vsel %vm474, %v666, 0
        %701 = vmatpush.xpose.msra.mxu0 0.0
        %702 = vmatpush.xpose.msra.mxu0 0.0
        %703 = vmatpush.xpose.msra.mxu0 0.0
        %704 = vmatpush.xpose.msra.mxu0 0.0
        %705 = vmatpush.xpose.msra.mxu0 0.0
        %706 = vmatpush.xpose.msra.mxu0 0.0
        %707 = vmatpush.xpose.msra.mxu0 0.0
        %708 = vmatpush.xpose.msra.mxu0 0.0
        %709 = vmatpush.xpose.msra.mxu0 0.0
        %710 = vmatpush.xpose.msra.mxu0 0.0
        %711 = vmatpush.xpose.msra.mxu0 0.0
        %712 = vmatpush.xpose.msra.mxu0 0.0
        %713 = vmatpush.xpose.msra.mxu0 0.0
        %714 = vmatpush.xpose.msra.mxu0 0.0
        %715 = vmatpush.xpose.msra.mxu0 0.0
        %716 = vmatpush.xpose.msra.mxu0 %v699
        %717 = vmatmul.f32.gmra.mxu0 %v696
        %v718 = vpop.f32.mrf.mxu0
        %v719 = vadd.f32 0.0, %v718
        %720 = vdwg.mxu0
        %vm721 = vcmask 31744
        %722 = vst.msk [vmem:[%s467] sm:$0xff] %vm721, %v719
        %p723 = scmp.lt.s32.totalorder %s28, 1
        %s724 = scalar_select %p723, %s28, 1
        %s725 = smul.addr %s724, 8
        %s726 = scalar_lea.vmem %s9, %s725
        // Predicated region
        $region85: #{tpu_custom_call.1} parent=55 // pred_check
          %p727 = pneg %p245
        $region86: #{tpu_custom_call.1} parent=55 // pred_check_branch
          %729 = sbr.rel (%p727) target = $region88
        $region87: #{tpu_custom_call.1} parent=55 // pred_region
          _
        $region88: #{tpu_custom_call.1} parent=55 // pred_fallthru
          _
      $region56: #{tpu_custom_call.1} parent=5 // pred_fallthru
        _
      %p730 = scmp.le.s32.totalorder 2, %s23
      // Predicated region
      $region89: #{tpu_custom_call.1} parent=5 // pred_check
        %p731 = pneg %p730
      $region90: #{tpu_custom_call.1} parent=5 // pred_check_branch
        %733 = sbr.rel (%p731) target = $region92
      $region91: #{tpu_custom_call.1} parent=5 // pred_region
        %s734 = ssub.s32 %s23, 2
        // Predicated region
        $region93: #{tpu_custom_call.1} parent=91 // pred_check
          %p735 = pneg %p251
        $region94: #{tpu_custom_call.1} parent=91 // pred_check_branch
          %737 = sbr.rel (%p735) target = $region96
        $region95: #{tpu_custom_call.1} parent=91 // pred_region
          %p738 = scmp.lt.s32.totalorder %s29, 1
          %s739 = scalar_select %p738, %s29, 1
          %s740 = smul.addr %s739, 8
          %s741 = scalar_lea.vmem %s9, %s740
        $region96: #{tpu_custom_call.1} parent=91 // pred_fallthru
          _
      $region92: #{tpu_custom_call.1} parent=5 // pred_fallthru
        _
    $region6: #{tpu_custom_call.1} parent=1 // loop_footer
      %s27 = sadd.s32 1, %s23
    $region7: #{tpu_custom_call.1} parent=1 // loop_footer_branch
      %22 = sbr.rel target = $region3
    $region8: #{tpu_custom_call.1} parent=1 // loop_exit
      _
    %742 = vsyncpa [#allocation3], 1
    %s743 = scalar_lea.sflag [#allocation3], 1
    %744 = vsyncpa %s743, 1
    %745 = vsyncpa [#allocation5], 1
    %s746 = scalar_lea.sflag [#allocation5], 1
    %747 = vsyncpa %s746, 1
    %748 = vsyncpa [#allocation8], 1
    %749 = vsyncpa [#allocation11], 1

</llo_original>
